<compile_context>
chip_gen: v6e
topology: v6e:2x2x1
jax: 0.10.0
libtpu: 0.0.40
codegen_flags: <defaults>
</compile_context>

<pallas_src>
import jax
import jax.numpy as jnp
from jax import lax
from jax.experimental import pallas as pl
from jax.experimental.pallas import tpu as pltpu

EPS = 1e-5


def residual_block_kernel(x_ref, t1_ref, t2_ref, g1_ref, b1_ref, g2_ref, b2_ref,
                          ssum_ref, sbrd_ref, out_ref):
    Hp, L = x_ref.shape               # (H + 4, N*W*Cin): 2 zero halo rows each side
    H = Hp - 4
    He = H + 2                        # conv1 evaluated on H+2 "extended" rows
    Cout = g1_ref.shape[-1]
    inv_count = 1.0 / float(H * (L // Cout))       # 1 / (N*H*W)   (Cin == Cout)

    ssum = ssum_ref[...]              # (L, Cout) f32: fold lanes -> channel
    sbrd = sbrd_ref[...]              # (Cout, L) f32: channel -> lanes

    def conv3(operand, t_ref):
        """3x3 same-padded conv = 3 MXU matmuls (one per kernel row dy)."""
        acc = None
        for dy in range(3):
            a = operand(dy).astype(jnp.bfloat16)           # bf16 MXU operand
            part = lax.dot_general(a, t_ref[dy], (((1,), (0,)), ((), ())),
                                   preferred_element_type=jnp.float32)
            acc = part if acc is None else acc + part
        return acc                                          # (rows, L) f32 accumulation

    def bn_fold(acc, g_ref, b_ref):
        """Training-mode (biased) batch stats folded into lane-dense scale/shift rows."""
        rs = jnp.sum(acc, axis=0, keepdims=True)            # (1, L)
        rss = jnp.sum(acc * acc, axis=0, keepdims=True)     # (1, L)
        sel = lax.broadcasted_iota(jnp.int32, (2, L), 0) == 0
        both = jnp.where(sel, jnp.broadcast_to(rs, (2, L)),
                         jnp.broadcast_to(rss, (2, L)))     # [sum ; sumsq]
        folded = lax.dot_general(both, ssum, (((1,), (0,)), ((), ())),
                                 preferred_element_type=jnp.float32)     # (2, Cout)
        mean = folded[0:1] * inv_count
        var = folded[1:2] * inv_count - mean * mean
        scale = g_ref[...] * lax.rsqrt(var + EPS)            # (1, Cout)
        shift = b_ref[...] - mean * scale                    # (1, Cout)
        selc = lax.broadcasted_iota(jnp.int32, (2, Cout), 0) == 0
        ss = jnp.where(selc, jnp.broadcast_to(scale, (2, Cout)),
                       jnp.broadcast_to(shift, (2, Cout)))   # [scale ; shift]
        rows = lax.dot_general(ss, sbrd, (((1,), (0,)), ((), ())),
                               preferred_element_type=jnp.float32)       # (2, L)
        return rows[0:1], rows[1:2]

    # ---- conv1 on H+2 extended rows (1 halo row each side) + bn1 + relu ----
    acc1 = conv3(lambda dy: x_ref[dy:dy + He, :], t1_ref)    # (He, L)
    ridx = lax.broadcasted_iota(jnp.int32, (He, L), 0)
    interior = (ridx >= 1) & (ridx <= H)
    acc1 = jnp.where(interior, acc1, 0.0)                    # halo rows -> 0 (BN stats & conv2 pad)
    sc1, sh1 = bn_fold(acc1, g1_ref, b1_ref)
    r = jnp.where(interior, jnp.maximum(acc1 * sc1 + sh1, 0.0), 0.0)     # (He, L)

    # ---- conv2 (dy operands are static slices of r; halo rows already zero) + bn2 ----
    acc2 = conv3(lambda dy: r[dy:dy + H, :], t2_ref)         # (H, L)
    sc2, sh2 = bn_fold(acc2, g2_ref, b2_ref)

    # ---- residual add (identity = interior rows of the padded input, f32) + relu ----
    identity = x_ref[2:2 + H, :]
    out = jnp.maximum(acc2 * sc2 + sh2 + identity, 0.0)
    out_ref[...] = out.astype(out_ref.dtype)                 # lane-dense (H, 128) store


def _band_weights(w_oihw, W, N):
    """(Cout, Cin, 3, 3) OIHW -> (3, N*W*Cin, N*W*Cout) batch-block-diagonal
    row-Toeplitz band matrices.

    band[dy, p*Cin+ci, q*Cout+co] = w[co, ci, dy, dx] with p = q + dx - 1;
    out-of-range p has no entry, which implements the width-direction 'same'
    padding.  The batch block-diagonal repeats the band once per packed batch.
    """
    Cout, Cin = w_oihw.shape[0], w_oihw.shape[1]
    w_hwio = jnp.transpose(w_oihw, (2, 3, 1, 0)).astype(jnp.float32)     # (3,3,Cin,Cout)
    shifts = jnp.stack([jnp.eye(W, W, k=1 - dx, dtype=jnp.float32)
                        for dx in range(3)])                              # (3, W_in, W_out)
    band = jnp.einsum('dpq,kdio->kpiqo', shifts, w_hwio)                  # (3, W, Cin, W, Cout)
    band = band.reshape(3, W * Cin, W * Cout)
    t = jnp.einsum('ab,kpq->kapbq', jnp.eye(N, dtype=jnp.float32), band)  # (3, N, WCin, N, WCout)
    return t.reshape(3, N * W * Cin, N * W * Cout)


def residual_block(x_nchw, w1, g1, b1, w2, g2, b2):
    """x_nchw: (N, C, H, W) f32; w1/w2: (Cout, Cin, 3, 3) PyTorch OIHW layout."""
    N, Cin, H, W = x_nchw.shape
    Cout = w1.shape[0]
    assert Cin == Cout, "stride=1 / downsample=None requires in_channels == out_channels"
    L = N * W * Cout

    # wrapper glue: batch packed into lanes -> 128-lane slabs, H-only halo (2 rows/side)
    x_lanes = jnp.transpose(x_nchw, (2, 0, 3, 1)).astype(jnp.float32).reshape(H, N * W * Cin)
    x_pad = jnp.pad(x_lanes, ((2, 2), (0, 0)))                            # (H+4, L)

    t1 = _band_weights(w1, W, N).astype(jnp.bfloat16)                     # (3, L, L) bf16
    t2 = _band_weights(w2, W, N).astype(jnp.bfloat16)
    g1_2d = g1.reshape(1, Cout).astype(jnp.float32)
    b1_2d = b1.reshape(1, Cout).astype(jnp.float32)
    g2_2d = g2.reshape(1, Cout).astype(jnp.float32)
    b2_2d = b2.reshape(1, Cout).astype(jnp.float32)

    eye = jnp.eye(Cout, dtype=jnp.float32)
    ssum = jnp.tile(eye, (N * W, 1))                                      # (L, Cout)
    sbrd = jnp.tile(eye, (1, N * W))                                      # (Cout, L)

    vmem = pl.BlockSpec(memory_space=pltpu.MemorySpace.VMEM)
    # TODO(synk): for production ResNet shapes (W*C >= 128), drop the batch-lane
    # packing, grid over (N, H)-row tiles with a 1-row halo and a two-pass BN
    # (per-tile sum/sumsq scratch, finalize with pl.when on the last tile), mark
    # the independent axis "parallel" for v7x's 2 TensorCores, and replace the
    # dense band matmul with a block-banded / im2col form so the weights stay
    # O(9*Cin*Cout) instead of O((W*Cin)*(W*Cout)).
    out2d = pl.pallas_call(
        residual_block_kernel,
        out_shape=jax.ShapeDtypeStruct((H, L), jnp.float32),
        in_specs=[vmem] * 9,
        out_specs=vmem,
        compiler_params=pltpu.CompilerParams(vmem_limit_bytes=32 * 1024 * 1024),
    )(x_pad, t1, t2, g1_2d, b1_2d, g2_2d, b2_2d, ssum, sbrd)

    out = out2d.reshape(H, N, W, Cout)
    return jnp.transpose(out, (1, 3, 0, 2))                               # back to NCHW


def reference(x, w1, g1, b1, w2, g2, b2):
    """Pure-JAX reference mirroring the PyTorch forward (training-mode BN)."""
    def conv(x, w):
        return lax.conv_general_dilated(
            x, w, (1, 1), ((1, 1), (1, 1)),
            dimension_numbers=('NCHW', 'OIHW', 'NCHW'))

    def bn(x, g, b):
        m = jnp.mean(x, axis=(0, 2, 3), keepdims=True)
        v = jnp.mean((x - m) ** 2, axis=(0, 2, 3), keepdims=True)
        return (x - m) / jnp.sqrt(v + EPS) * g.reshape(1, -1, 1, 1) + b.reshape(1, -1, 1, 1)

    r = jax.nn.relu(bn(conv(x, w1), g1, b1))
    r = bn(conv(r, w2), g2, b2)
    return jax.nn.relu(r + x)


if __name__ == "__main__":
    key = jax.random.PRNGKey(0)
    N, C, H, W = 2, 4, 16, 16     # in_channels == out_channels (stride=1, no downsample)
    ks = jax.random.split(key, 7)
    x = jax.random.normal(ks[0], (N, C, H, W), jnp.float32)
    w1 = 0.1 * jax.random.normal(ks[1], (C, C, 3, 3), jnp.float32)
    w2 = 0.1 * jax.random.normal(ks[2], (C, C, 3, 3), jnp.float32)
    g1 = 1.0 + 0.1 * jax.random.normal(ks[3], (C,), jnp.float32)
    b1 = 0.1 * jax.random.normal(ks[4], (C,), jnp.float32)
    g2 = 1.0 + 0.1 * jax.random.normal(ks[5], (C,), jnp.float32)
    b2 = 0.1 * jax.random.normal(ks[6], (C,), jnp.float32)

    out = residual_block(x, w1, g1, b1, w2, g2, b2)
    jax.block_until_ready(out)

    ref = reference(x, w1, g1, b1, w2, g2, b2)
    # Tolerance reflects bf16 MXU operands (accumulation and BN math are f32).
    assert jnp.allclose(out, ref, atol=5e-2, rtol=5e-2), \
        f"max abs diff = {float(jnp.max(jnp.abs(out - ref)))}"
    print("KERNEL_OK")
</pallas_src>

<mosaic_0001>
module attributes {stable_mosaic.version = 11 : i64} {
  func.func @residual_block_kernel(%arg0: memref<20x128xf32, #tpu.memory_space<vmem>>, %arg1: memref<3x128x128xbf16, #tpu.memory_space<vmem>>, %arg2: memref<3x128x128xbf16, #tpu.memory_space<vmem>>, %arg3: memref<1x4xf32, #tpu.memory_space<vmem>>, %arg4: memref<1x4xf32, #tpu.memory_space<vmem>>, %arg5: memref<1x4xf32, #tpu.memory_space<vmem>>, %arg6: memref<1x4xf32, #tpu.memory_space<vmem>>, %arg7: memref<128x4xf32, #tpu.memory_space<vmem>>, %arg8: memref<4x128xf32, #tpu.memory_space<vmem>>, %arg9: memref<16x128xf32, #tpu.memory_space<vmem>>) attributes {dimension_semantics = [], scalar_prefetch = 0 : i64, scratch_operands = 0 : i64, tpu.core_type = #tpu.core_type<tc>} {
    %c0 = arith.constant 0 : index
    %c0_0 = arith.constant 0 : index
    %0 = vector.load %arg7[%c0, %c0_0] : memref<128x4xf32, #tpu.memory_space<vmem>>, vector<128x4xf32>
    %c0_1 = arith.constant 0 : index
    %c0_2 = arith.constant 0 : index
    %1 = vector.load %arg8[%c0_1, %c0_2] : memref<4x128xf32, #tpu.memory_space<vmem>>, vector<4x128xf32>
    %c0_3 = arith.constant 0 : index
    %c0_4 = arith.constant 0 : index
    %2 = vector.load %arg0[%c0_3, %c0_4] : memref<20x128xf32, #tpu.memory_space<vmem>>, vector<18x128xf32>
    %3 = arith.truncf %2 : vector<18x128xf32> to vector<18x128xbf16>
    %c0_5 = arith.constant 0 : index
    %c0_6 = arith.constant 0 : index
    %c0_7 = arith.constant 0 : index
    %4 = vector.load %arg1[%c0_5, %c0_6, %c0_7] : memref<3x128x128xbf16, #tpu.memory_space<vmem>>, vector<1x128x128xbf16>
    %5 = vector.shape_cast %4 : vector<1x128x128xbf16> to vector<128x128xbf16>
    %cst = arith.constant dense<0.000000e+00> : vector<18x128xf32>
    %6 = tpu.matmul %3, %5, %cst {dimension_numbers = #tpu.dot_dimension_numbers<[1], [0], [0], [1], [0, 0, 1, 1], [], []>} : vector<18x128xbf16>, vector<128x128xbf16>, vector<18x128xf32> -> vector<18x128xf32>
    %c1 = arith.constant 1 : index
    %c0_8 = arith.constant 0 : index
    %7 = vector.load %arg0[%c1, %c0_8] : memref<20x128xf32, #tpu.memory_space<vmem>>, vector<18x128xf32>
    %8 = arith.truncf %7 : vector<18x128xf32> to vector<18x128xbf16>
    %c1_9 = arith.constant 1 : index
    %c0_10 = arith.constant 0 : index
    %c0_11 = arith.constant 0 : index
    %9 = vector.load %arg1[%c1_9, %c0_10, %c0_11] : memref<3x128x128xbf16, #tpu.memory_space<vmem>>, vector<1x128x128xbf16>
    %10 = vector.shape_cast %9 : vector<1x128x128xbf16> to vector<128x128xbf16>
    %cst_12 = arith.constant dense<0.000000e+00> : vector<18x128xf32>
    %11 = tpu.matmul %8, %10, %cst_12 {dimension_numbers = #tpu.dot_dimension_numbers<[1], [0], [0], [1], [0, 0, 1, 1], [], []>} : vector<18x128xbf16>, vector<128x128xbf16>, vector<18x128xf32> -> vector<18x128xf32>
    %12 = arith.addf %6, %11 : vector<18x128xf32>
    %c2 = arith.constant 2 : index
    %c0_13 = arith.constant 0 : index
    %13 = vector.load %arg0[%c2, %c0_13] : memref<20x128xf32, #tpu.memory_space<vmem>>, vector<18x128xf32>
    %14 = arith.truncf %13 : vector<18x128xf32> to vector<18x128xbf16>
    %c2_14 = arith.constant 2 : index
    %c0_15 = arith.constant 0 : index
    %c0_16 = arith.constant 0 : index
    %15 = vector.load %arg1[%c2_14, %c0_15, %c0_16] : memref<3x128x128xbf16, #tpu.memory_space<vmem>>, vector<1x128x128xbf16>
    %16 = vector.shape_cast %15 : vector<1x128x128xbf16> to vector<128x128xbf16>
    %cst_17 = arith.constant dense<0.000000e+00> : vector<18x128xf32>
    %17 = tpu.matmul %14, %16, %cst_17 {dimension_numbers = #tpu.dot_dimension_numbers<[1], [0], [0], [1], [0, 0, 1, 1], [], []>} : vector<18x128xbf16>, vector<128x128xbf16>, vector<18x128xf32> -> vector<18x128xf32>
    %18 = arith.addf %12, %17 : vector<18x128xf32>
    %19 = tpu.iota {dimensions = array<i32: 0>} : vector<18x128xi32>
    %c1_i32 = arith.constant 1 : i32
    %20 = vector.broadcast %c1_i32 : i32 to vector<18x128xi32>
    %21 = arith.cmpi sge, %19, %20 : vector<18x128xi32>
    %c16_i32 = arith.constant 16 : i32
    %22 = vector.broadcast %c16_i32 : i32 to vector<18x128xi32>
    %23 = arith.cmpi sle, %19, %22 : vector<18x128xi32>
    %24 = arith.andi %21, %23 : vector<18x128xi1>
    %cst_18 = arith.constant 0.000000e+00 : f32
    %25 = vector.broadcast %cst_18 : f32 to vector<18x128xf32>
    %26 = arith.select %24, %18, %25 : vector<18x128xi1>, vector<18x128xf32>
    %cst_19 = arith.constant dense<0.000000e+00> : vector<128xf32>
    %27 = vector.multi_reduction <add>, %26, %cst_19 [0] : vector<18x128xf32> to vector<128xf32>
    %28 = vector.shape_cast %27 : vector<128xf32> to vector<1x128xf32>
    %29 = arith.mulf %26, %26 : vector<18x128xf32>
    %cst_20 = arith.constant dense<0.000000e+00> : vector<128xf32>
    %30 = vector.multi_reduction <add>, %29, %cst_20 [0] : vector<18x128xf32> to vector<128xf32>
    %31 = vector.shape_cast %30 : vector<128xf32> to vector<1x128xf32>
    %32 = tpu.iota {dimensions = array<i32: 0>} : vector<2x128xi32>
    %c0_i32 = arith.constant 0 : i32
    %33 = vector.broadcast %c0_i32 : i32 to vector<2x128xi32>
    %34 = arith.cmpi eq, %32, %33 : vector<2x128xi32>
    %35 = vector.shape_cast %28 : vector<1x128xf32> to vector<1x128xf32>
    %36 = vector.broadcast %35 : vector<1x128xf32> to vector<2x128xf32>
    %37 = vector.shape_cast %31 : vector<1x128xf32> to vector<1x128xf32>
    %38 = vector.broadcast %37 : vector<1x128xf32> to vector<2x128xf32>
    %39 = arith.select %34, %36, %38 : vector<2x128xi1>, vector<2x128xf32>
    %cst_21 = arith.constant dense<0.000000e+00> : vector<2x4xf32>
    %40 = tpu.matmul %39, %0, %cst_21 {dimension_numbers = #tpu.dot_dimension_numbers<[1], [0], [0], [1], [0, 0, 1, 1], [], []>} : vector<2x128xf32>, vector<128x4xf32>, vector<2x4xf32> -> vector<2x4xf32>
    %41 = vector.extract_strided_slice %40 {offsets = [0, 0], sizes = [1, 4], strides = [1, 1]} : vector<2x4xf32> to vector<1x4xf32>
    %cst_22 = arith.constant 0.001953125 : f32
    %42 = vector.broadcast %cst_22 : f32 to vector<1x4xf32>
    %43 = arith.mulf %41, %42 : vector<1x4xf32>
    %44 = vector.extract_strided_slice %40 {offsets = [1, 0], sizes = [1, 4], strides = [1, 1]} : vector<2x4xf32> to vector<1x4xf32>
    %cst_23 = arith.constant 0.001953125 : f32
    %45 = vector.broadcast %cst_23 : f32 to vector<1x4xf32>
    %46 = arith.mulf %44, %45 : vector<1x4xf32>
    %47 = arith.mulf %43, %43 : vector<1x4xf32>
    %48 = arith.subf %46, %47 : vector<1x4xf32>
    %c0_24 = arith.constant 0 : index
    %c0_25 = arith.constant 0 : index
    %49 = vector.load %arg3[%c0_24, %c0_25] : memref<1x4xf32, #tpu.memory_space<vmem>>, vector<1x4xf32>
    %cst_26 = arith.constant 9.99999974E-6 : f32
    %50 = vector.broadcast %cst_26 : f32 to vector<1x4xf32>
    %51 = arith.addf %48, %50 : vector<1x4xf32>
    %52 = math.rsqrt %51 : vector<1x4xf32>
    %53 = arith.mulf %49, %52 : vector<1x4xf32>
    %c0_27 = arith.constant 0 : index
    %c0_28 = arith.constant 0 : index
    %54 = vector.load %arg4[%c0_27, %c0_28] : memref<1x4xf32, #tpu.memory_space<vmem>>, vector<1x4xf32>
    %55 = arith.mulf %43, %53 : vector<1x4xf32>
    %56 = arith.subf %54, %55 : vector<1x4xf32>
    %57 = tpu.iota {dimensions = array<i32: 0>} : vector<2x4xi32>
    %c0_i32_29 = arith.constant 0 : i32
    %58 = vector.broadcast %c0_i32_29 : i32 to vector<2x4xi32>
    %59 = arith.cmpi eq, %57, %58 : vector<2x4xi32>
    %60 = vector.shape_cast %53 : vector<1x4xf32> to vector<1x4xf32>
    %61 = vector.broadcast %60 : vector<1x4xf32> to vector<2x4xf32>
    %62 = vector.shape_cast %56 : vector<1x4xf32> to vector<1x4xf32>
    %63 = vector.broadcast %62 : vector<1x4xf32> to vector<2x4xf32>
    %64 = arith.select %59, %61, %63 : vector<2x4xi1>, vector<2x4xf32>
    %cst_30 = arith.constant dense<0.000000e+00> : vector<2x128xf32>
    %65 = tpu.matmul %64, %1, %cst_30 {dimension_numbers = #tpu.dot_dimension_numbers<[1], [0], [0], [1], [0, 0, 1, 1], [], []>} : vector<2x4xf32>, vector<4x128xf32>, vector<2x128xf32> -> vector<2x128xf32>
    %66 = vector.extract_strided_slice %65 {offsets = [0, 0], sizes = [1, 128], strides = [1, 1]} : vector<2x128xf32> to vector<1x128xf32>
    %67 = vector.extract_strided_slice %65 {offsets = [1, 0], sizes = [1, 128], strides = [1, 1]} : vector<2x128xf32> to vector<1x128xf32>
    %68 = vector.broadcast %66 : vector<1x128xf32> to vector<18x128xf32>
    %69 = arith.mulf %26, %68 : vector<18x128xf32>
    %70 = vector.broadcast %67 : vector<1x128xf32> to vector<18x128xf32>
    %71 = arith.addf %69, %70 : vector<18x128xf32>
    %cst_31 = arith.constant 0.000000e+00 : f32
    %72 = vector.broadcast %cst_31 : f32 to vector<18x128xf32>
    %73 = arith.maximumf %71, %72 : vector<18x128xf32>
    %cst_32 = arith.constant 0.000000e+00 : f32
    %74 = vector.broadcast %cst_32 : f32 to vector<18x128xf32>
    %75 = arith.select %24, %73, %74 : vector<18x128xi1>, vector<18x128xf32>
    %76 = vector.extract_strided_slice %75 {offsets = [0, 0], sizes = [16, 128], strides = [1, 1]} : vector<18x128xf32> to vector<16x128xf32>
    %77 = arith.truncf %76 : vector<16x128xf32> to vector<16x128xbf16>
    %c0_33 = arith.constant 0 : index
    %c0_34 = arith.constant 0 : index
    %c0_35 = arith.constant 0 : index
    %78 = vector.load %arg2[%c0_33, %c0_34, %c0_35] : memref<3x128x128xbf16, #tpu.memory_space<vmem>>, vector<1x128x128xbf16>
    %79 = vector.shape_cast %78 : vector<1x128x128xbf16> to vector<128x128xbf16>
    %cst_36 = arith.constant dense<0.000000e+00> : vector<16x128xf32>
    %80 = tpu.matmul %77, %79, %cst_36 {dimension_numbers = #tpu.dot_dimension_numbers<[1], [0], [0], [1], [0, 0, 1, 1], [], []>} : vector<16x128xbf16>, vector<128x128xbf16>, vector<16x128xf32> -> vector<16x128xf32>
    %81 = vector.extract_strided_slice %75 {offsets = [1, 0], sizes = [16, 128], strides = [1, 1]} : vector<18x128xf32> to vector<16x128xf32>
    %82 = arith.truncf %81 : vector<16x128xf32> to vector<16x128xbf16>
    %c1_37 = arith.constant 1 : index
    %c0_38 = arith.constant 0 : index
    %c0_39 = arith.constant 0 : index
    %83 = vector.load %arg2[%c1_37, %c0_38, %c0_39] : memref<3x128x128xbf16, #tpu.memory_space<vmem>>, vector<1x128x128xbf16>
    %84 = vector.shape_cast %83 : vector<1x128x128xbf16> to vector<128x128xbf16>
    %cst_40 = arith.constant dense<0.000000e+00> : vector<16x128xf32>
    %85 = tpu.matmul %82, %84, %cst_40 {dimension_numbers = #tpu.dot_dimension_numbers<[1], [0], [0], [1], [0, 0, 1, 1], [], []>} : vector<16x128xbf16>, vector<128x128xbf16>, vector<16x128xf32> -> vector<16x128xf32>
    %86 = arith.addf %80, %85 : vector<16x128xf32>
    %87 = vector.extract_strided_slice %75 {offsets = [2, 0], sizes = [16, 128], strides = [1, 1]} : vector<18x128xf32> to vector<16x128xf32>
    %88 = arith.truncf %87 : vector<16x128xf32> to vector<16x128xbf16>
    %c2_41 = arith.constant 2 : index
    %c0_42 = arith.constant 0 : index
    %c0_43 = arith.constant 0 : index
    %89 = vector.load %arg2[%c2_41, %c0_42, %c0_43] : memref<3x128x128xbf16, #tpu.memory_space<vmem>>, vector<1x128x128xbf16>
    %90 = vector.shape_cast %89 : vector<1x128x128xbf16> to vector<128x128xbf16>
    %cst_44 = arith.constant dense<0.000000e+00> : vector<16x128xf32>
    %91 = tpu.matmul %88, %90, %cst_44 {dimension_numbers = #tpu.dot_dimension_numbers<[1], [0], [0], [1], [0, 0, 1, 1], [], []>} : vector<16x128xbf16>, vector<128x128xbf16>, vector<16x128xf32> -> vector<16x128xf32>
    %92 = arith.addf %86, %91 : vector<16x128xf32>
    %cst_45 = arith.constant dense<0.000000e+00> : vector<128xf32>
    %93 = vector.multi_reduction <add>, %92, %cst_45 [0] : vector<16x128xf32> to vector<128xf32>
    %94 = vector.shape_cast %93 : vector<128xf32> to vector<1x128xf32>
    %95 = arith.mulf %92, %92 : vector<16x128xf32>
    %cst_46 = arith.constant dense<0.000000e+00> : vector<128xf32>
    %96 = vector.multi_reduction <add>, %95, %cst_46 [0] : vector<16x128xf32> to vector<128xf32>
    %97 = vector.shape_cast %96 : vector<128xf32> to vector<1x128xf32>
    %98 = tpu.iota {dimensions = array<i32: 0>} : vector<2x128xi32>
    %c0_i32_47 = arith.constant 0 : i32
    %99 = vector.broadcast %c0_i32_47 : i32 to vector<2x128xi32>
    %100 = arith.cmpi eq, %98, %99 : vector<2x128xi32>
    %101 = vector.shape_cast %94 : vector<1x128xf32> to vector<1x128xf32>
    %102 = vector.broadcast %101 : vector<1x128xf32> to vector<2x128xf32>
    %103 = vector.shape_cast %97 : vector<1x128xf32> to vector<1x128xf32>
    %104 = vector.broadcast %103 : vector<1x128xf32> to vector<2x128xf32>
    %105 = arith.select %100, %102, %104 : vector<2x128xi1>, vector<2x128xf32>
    %cst_48 = arith.constant dense<0.000000e+00> : vector<2x4xf32>
    %106 = tpu.matmul %105, %0, %cst_48 {dimension_numbers = #tpu.dot_dimension_numbers<[1], [0], [0], [1], [0, 0, 1, 1], [], []>} : vector<2x128xf32>, vector<128x4xf32>, vector<2x4xf32> -> vector<2x4xf32>
    %107 = vector.extract_strided_slice %106 {offsets = [0, 0], sizes = [1, 4], strides = [1, 1]} : vector<2x4xf32> to vector<1x4xf32>
    %cst_49 = arith.constant 0.001953125 : f32
    %108 = vector.broadcast %cst_49 : f32 to vector<1x4xf32>
    %109 = arith.mulf %107, %108 : vector<1x4xf32>
    %110 = vector.extract_strided_slice %106 {offsets = [1, 0], sizes = [1, 4], strides = [1, 1]} : vector<2x4xf32> to vector<1x4xf32>
    %cst_50 = arith.constant 0.001953125 : f32
    %111 = vector.broadcast %cst_50 : f32 to vector<1x4xf32>
    %112 = arith.mulf %110, %111 : vector<1x4xf32>
    %113 = arith.mulf %109, %109 : vector<1x4xf32>
    %114 = arith.subf %112, %113 : vector<1x4xf32>
    %c0_51 = arith.constant 0 : index
    %c0_52 = arith.constant 0 : index
    %115 = vector.load %arg5[%c0_51, %c0_52] : memref<1x4xf32, #tpu.memory_space<vmem>>, vector<1x4xf32>
    %cst_53 = arith.constant 9.99999974E-6 : f32
    %116 = vector.broadcast %cst_53 : f32 to vector<1x4xf32>
    %117 = arith.addf %114, %116 : vector<1x4xf32>
    %118 = math.rsqrt %117 : vector<1x4xf32>
    %119 = arith.mulf %115, %118 : vector<1x4xf32>
    %c0_54 = arith.constant 0 : index
    %c0_55 = arith.constant 0 : index
    %120 = vector.load %arg6[%c0_54, %c0_55] : memref<1x4xf32, #tpu.memory_space<vmem>>, vector<1x4xf32>
    %121 = arith.mulf %109, %119 : vector<1x4xf32>
    %122 = arith.subf %120, %121 : vector<1x4xf32>
    %123 = tpu.iota {dimensions = array<i32: 0>} : vector<2x4xi32>
    %c0_i32_56 = arith.constant 0 : i32
    %124 = vector.broadcast %c0_i32_56 : i32 to vector<2x4xi32>
    %125 = arith.cmpi eq, %123, %124 : vector<2x4xi32>
    %126 = vector.shape_cast %119 : vector<1x4xf32> to vector<1x4xf32>
    %127 = vector.broadcast %126 : vector<1x4xf32> to vector<2x4xf32>
    %128 = vector.shape_cast %122 : vector<1x4xf32> to vector<1x4xf32>
    %129 = vector.broadcast %128 : vector<1x4xf32> to vector<2x4xf32>
    %130 = arith.select %125, %127, %129 : vector<2x4xi1>, vector<2x4xf32>
    %cst_57 = arith.constant dense<0.000000e+00> : vector<2x128xf32>
    %131 = tpu.matmul %130, %1, %cst_57 {dimension_numbers = #tpu.dot_dimension_numbers<[1], [0], [0], [1], [0, 0, 1, 1], [], []>} : vector<2x4xf32>, vector<4x128xf32>, vector<2x128xf32> -> vector<2x128xf32>
    %132 = vector.extract_strided_slice %131 {offsets = [0, 0], sizes = [1, 128], strides = [1, 1]} : vector<2x128xf32> to vector<1x128xf32>
    %133 = vector.extract_strided_slice %131 {offsets = [1, 0], sizes = [1, 128], strides = [1, 1]} : vector<2x128xf32> to vector<1x128xf32>
    %c2_58 = arith.constant 2 : index
    %c0_59 = arith.constant 0 : index
    %134 = vector.load %arg0[%c2_58, %c0_59] : memref<20x128xf32, #tpu.memory_space<vmem>>, vector<16x128xf32>
    %135 = vector.broadcast %132 : vector<1x128xf32> to vector<16x128xf32>
    %136 = arith.mulf %92, %135 : vector<16x128xf32>
    %137 = vector.broadcast %133 : vector<1x128xf32> to vector<16x128xf32>
    %138 = arith.addf %136, %137 : vector<16x128xf32>
    %139 = arith.addf %138, %134 : vector<16x128xf32>
    %cst_60 = arith.constant 0.000000e+00 : f32
    %140 = vector.broadcast %cst_60 : f32 to vector<16x128xf32>
    %141 = arith.maximumf %139, %140 : vector<16x128xf32>
    %c0_61 = arith.constant 0 : index
    %c0_62 = arith.constant 0 : index
    %142 = vector.load %arg9[%c0_61, %c0_62] : memref<16x128xf32, #tpu.memory_space<vmem>>, vector<16x128xf32>
    tpu.vector_store %arg9[%c0_61, %c0_62], %141 {strides = array<i32>} : memref<16x128xf32, #tpu.memory_space<vmem>>, vector<16x128xf32>,
    return
  }
}

</mosaic_0001>

<llo_original>
// kernel: tpu_custom_call.1
$region0: #{tpu_custom_call.1}
  #allocation0 [shape = 'u32[]', space=smem, size = 0x4, offset = 0x4, fixed_abs, tag = 'smem constant byte address 0x4 - core index']
  #allocation1 [shape = 'u32[144,128]{1,0:T(1,128)}', space=vmem, size = 0x12000, scoped, tag = 'internal scratch']
  %s0 = inlined_call_operand.vmem [shape: f32[20,128], index: 0, kind: input, shape index: {}]
  %s1 = inlined_call_operand.hbm [shape: bf16[3,128,128], index: 1, kind: input, shape index: {}]
  %s2 = inlined_call_operand.hbm [shape: bf16[3,128,128], index: 2, kind: input, shape index: {}]
  %s3 = inlined_call_operand.vmem [shape: f32[1,4], index: 3, kind: input, shape index: {}]
  %s4 = inlined_call_operand.vmem [shape: f32[1,4], index: 4, kind: input, shape index: {}]
  %s5 = inlined_call_operand.vmem [shape: f32[1,4], index: 5, kind: input, shape index: {}]
  %s6 = inlined_call_operand.vmem [shape: f32[1,4], index: 6, kind: input, shape index: {}]
  %s7 = inlined_call_operand.vmem [shape: f32[128,4], index: 7, kind: input, shape index: {}]
  %s8 = inlined_call_operand.vmem [shape: f32[4,128], index: 8, kind: input, shape index: {}]
  %s9 = inlined_call_operand.hbm [shape: f32[16,128], index: 9, kind: output, shape index: {}]
  %s10 = sld [smem:[#allocation0]]
  $region54: #{tpu_custom_call.1} parent=0
    _
  %s12 = ssub.s32 1, %s10
  %s13 = scalar_select 0, %s12, %s10
  $region1: #{tpu_custom_call.1} parent=0
    #allocation2 [shape = 'u8[98304]{0}', space=vmem, size = 0x18000, scoped, tag = 'input window, operand 1, single buffered']
    #allocation3 [shape = 's32[1]{0}', space=sflag, size = 0x4, scoped, tag = 'scoped memory for tpu_custom_call.1']
    #allocation4 [shape = 's32[1]{0}', space=sflag, size = 0x4, scoped, tag = 'scoped memory for tpu_custom_call.1']
    #allocation5 [shape = 'u8[98304]{0}', space=vmem, size = 0x18000, scoped, tag = 'input window, operand 2, single buffered']
    #allocation6 [shape = 's32[1]{0}', space=sflag, size = 0x4, scoped, tag = 'scoped memory for tpu_custom_call.1']
    #allocation7 [shape = 'u8[8192]{0}', space=vmem, size = 0x2000, scoped, tag = 'output window, operand 0, single buffered']
    %14 = vsyncpa [#allocation3], 0
    %15 = vsyncpa [#allocation6], 0
    %16 = vsyncpa [#allocation4], 0
    // Predicated region
    $region2: #{tpu_custom_call.1} parent=1 // pred_check
      _
    $region3: #{tpu_custom_call.1} parent=1 // pred_check_branch
      %18 = sbr.rel (0) target = $region5
    $region4: #{tpu_custom_call.1} parent=1 // pred_region
      _
    $region5: #{tpu_custom_call.1} parent=1 // pred_fallthru
      _
    // Predicated region
    $region6: #{tpu_custom_call.1} parent=1 // pred_check
      _
    $region7: #{tpu_custom_call.1} parent=1 // pred_check_branch
      %20 = sbr.rel (0) target = $region9
    $region8: #{tpu_custom_call.1} parent=1 // pred_region
      %s22 = ssub.s32 3072, 3072
      %23 = vsyncadd [#allocation3], %s22
      %s24 = sshll.u32 [#allocation2], 4
      %s25 = int_to_ptr.vmem [resolvable:$true] %s24
      %30 = dma.hbm_to_vmem [thread:$0]  %s1, 3072, %s25, [#allocation3], 64, 64, 4
    $region9: #{tpu_custom_call.1} parent=1 // pred_fallthru
      _
    // Predicated region
    $region10: #{tpu_custom_call.1} parent=1 // pred_check
      _
    $region11: #{tpu_custom_call.1} parent=1 // pred_check_branch
      %32 = sbr.rel (0) target = $region13
    $region12: #{tpu_custom_call.1} parent=1 // pred_region
      %s34 = ssub.s32 3072, 3072
      %35 = vsyncadd [#allocation6], %s34
      %s36 = sshll.u32 [#allocation5], 4
      %s37 = int_to_ptr.vmem [resolvable:$true] %s36
      %42 = dma.hbm_to_vmem [thread:$0]  %s2, 3072, %s37, [#allocation6], 64, 64, 4
    $region13: #{tpu_custom_call.1} parent=1 // pred_fallthru
      _
    // Predicated region
    $region14: #{tpu_custom_call.1} parent=1 // pred_check
      _
    $region15: #{tpu_custom_call.1} parent=1 // pred_check_branch
      %44 = sbr.rel (0) target = $region17
    $region16: #{tpu_custom_call.1} parent=1 // pred_region
      _
    $region17: #{tpu_custom_call.1} parent=1 // pred_fallthru
      _
    // Predicated region
    $region18: #{tpu_custom_call.1} parent=1 // pred_check
      _
    $region19: #{tpu_custom_call.1} parent=1 // pred_check_branch
      %46 = sbr.rel (0) target = $region21
    $region20: #{tpu_custom_call.1} parent=1 // pred_region
      _
    $region21: #{tpu_custom_call.1} parent=1 // pred_fallthru
      _
    // Predicated region
    $region22: #{tpu_custom_call.1} parent=1 // pred_check
      _
    $region23: #{tpu_custom_call.1} parent=1 // pred_check_branch
      %48 = sbr.rel (0) target = $region25
    $region24: #{tpu_custom_call.1} parent=1 // pred_region
      _
    $region25: #{tpu_custom_call.1} parent=1 // pred_fallthru
      _
    // Predicated region
    $region26: #{tpu_custom_call.1} parent=1 // pred_check
      _
    $region27: #{tpu_custom_call.1} parent=1 // pred_check_branch
      %50 = sbr.rel (0) target = $region29
    $region28: #{tpu_custom_call.1} parent=1 // pred_region
      _
    $region29: #{tpu_custom_call.1} parent=1 // pred_fallthru
      _
    // Predicated region
    $region30: #{tpu_custom_call.1} parent=1 // pred_check
      _
    $region31: #{tpu_custom_call.1} parent=1 // pred_check_branch
      %52 = sbr.rel (0) target = $region33
    $region32: #{tpu_custom_call.1} parent=1 // pred_region
      _
    $region33: #{tpu_custom_call.1} parent=1 // pred_fallthru
      _
    // Predicated region
    $region34: #{tpu_custom_call.1} parent=1 // pred_check
      _
    $region35: #{tpu_custom_call.1} parent=1 // pred_check_branch
      %54 = sbr.rel (0) target = $region37
    $region36: #{tpu_custom_call.1} parent=1 // pred_region
      _
    $region37: #{tpu_custom_call.1} parent=1 // pred_fallthru
      _
    // Predicated region
    $region38: #{tpu_custom_call.1} parent=1 // pred_check
      _
    $region39: #{tpu_custom_call.1} parent=1 // pred_check_branch
      %56 = sbr.rel (0) target = $region41
    $region40: #{tpu_custom_call.1} parent=1 // pred_region
      %57 = dma.done [#allocation3], 3072
    $region41: #{tpu_custom_call.1} parent=1 // pred_fallthru
      _
    // Predicated region
    $region42: #{tpu_custom_call.1} parent=1 // pred_check
      _
    $region43: #{tpu_custom_call.1} parent=1 // pred_check_branch
      %59 = sbr.rel (0) target = $region45
    $region44: #{tpu_custom_call.1} parent=1 // pred_region
      %60 = dma.done [#allocation6], 3072
    $region45: #{tpu_custom_call.1} parent=1 // pred_fallthru
      _
    %v62 = vld [vmem:[%s7] sm:$0xff]
    %v63 = vld [vmem:[%s7 + $0x8] sm:$0xff]
    %v64 = vld [vmem:[%s7 + $0x10] sm:$0xff]
    %v65 = vld [vmem:[%s7 + $0x18] sm:$0xff]
    %v66 = vld [vmem:[%s7 + $0x20] sm:$0xff]
    %v67 = vld [vmem:[%s7 + $0x28] sm:$0xff]
    %v68 = vld [vmem:[%s7 + $0x30] sm:$0xff]
    %v69 = vld [vmem:[%s7 + $0x38] sm:$0xff]
    %v70 = vld [vmem:[%s7 + $0x40] sm:$0xff]
    %v71 = vld [vmem:[%s7 + $0x48] sm:$0xff]
    %v72 = vld [vmem:[%s7 + $0x50] sm:$0xff]
    %v73 = vld [vmem:[%s7 + $0x58] sm:$0xff]
    %v74 = vld [vmem:[%s7 + $0x60] sm:$0xff]
    %v75 = vld [vmem:[%s7 + $0x68] sm:$0xff]
    %v76 = vld [vmem:[%s7 + $0x70] sm:$0xff]
    %v77 = vld [vmem:[%s7 + $0x78] sm:$0xff]
    %v78 = vld [vmem:[%s8] sm:$0xf]
    %v79 = vld [vmem:[%s0] sm:$0xff]
    %v80 = vld [vmem:[%s0 + $0x8] sm:$0xff]
    %v81 = vld [vmem:[%s0 + $0x10] sm:$0x3]
    %v82 = vpack.c.bf16 %v80, %v79
    %v83 = vpack.c.bf16 %v81, %v81
    %v84 = vld [vmem:[#allocation2] sm:$0xf]
    %v85 = vld [vmem:[#allocation2 + $0x4] sm:$0xf]
    %v86 = vld [vmem:[#allocation2 + $0x8] sm:$0xf]
    %v87 = vld [vmem:[#allocation2 + $0xc] sm:$0xf]
    %v88 = vld [vmem:[#allocation2 + $0x10] sm:$0xf]
    %v89 = vld [vmem:[#allocation2 + $0x14] sm:$0xf]
    %v90 = vld [vmem:[#allocation2 + $0x18] sm:$0xf]
    %v91 = vld [vmem:[#allocation2 + $0x1c] sm:$0xf]
    %v92 = vld [vmem:[#allocation2 + $0x20] sm:$0xf]
    %v93 = vld [vmem:[#allocation2 + $0x24] sm:$0xf]
    %v94 = vld [vmem:[#allocation2 + $0x28] sm:$0xf]
    %v95 = vld [vmem:[#allocation2 + $0x2c] sm:$0xf]
    %v96 = vld [vmem:[#allocation2 + $0x30] sm:$0xf]
    %v97 = vld [vmem:[#allocation2 + $0x34] sm:$0xf]
    %v98 = vld [vmem:[#allocation2 + $0x38] sm:$0xf]
    %v99 = vld [vmem:[#allocation2 + $0x3c] sm:$0xf]
    %v100 = vld [vmem:[%s0 + $0x1] sm:$0xff]
    %v101 = vld [vmem:[%s0 + $0x9] sm:$0xff]
    %v102 = vld [vmem:[%s0 + $0x11] sm:$0x3]
    %v103 = vpack.c.bf16 %v101, %v100
    %v104 = vpack.c.bf16 %v102, %v102
    %s105 = scalar_lea.vmem [#allocation2], 64
    %v106 = vld [vmem:[%s105] sm:$0xf]
    %v107 = vld [vmem:[%s105 + $0x4] sm:$0xf]
    %v108 = vld [vmem:[%s105 + $0x8] sm:$0xf]
    %v109 = vld [vmem:[%s105 + $0xc] sm:$0xf]
    %v110 = vld [vmem:[%s105 + $0x10] sm:$0xf]
    %v111 = vld [vmem:[%s105 + $0x14] sm:$0xf]
    %v112 = vld [vmem:[%s105 + $0x18] sm:$0xf]
    %v113 = vld [vmem:[%s105 + $0x1c] sm:$0xf]
    %v114 = vld [vmem:[%s105 + $0x20] sm:$0xf]
    %v115 = vld [vmem:[%s105 + $0x24] sm:$0xf]
    %v116 = vld [vmem:[%s105 + $0x28] sm:$0xf]
    %v117 = vld [vmem:[%s105 + $0x2c] sm:$0xf]
    %v118 = vld [vmem:[%s105 + $0x30] sm:$0xf]
    %v119 = vld [vmem:[%s105 + $0x34] sm:$0xf]
    %v120 = vld [vmem:[%s105 + $0x38] sm:$0xf]
    %v121 = vld [vmem:[%s105 + $0x3c] sm:$0xf]
    %v138 = vunpack.c.l.b16 %v106
    %v139 = vunpack.c.l.b16 %v107
    %v140 = vunpack.c.l.b16 %v108
    %v141 = vunpack.c.l.b16 %v109
    %v142 = vunpack.c.l.b16 %v110
    %v143 = vunpack.c.l.b16 %v111
    %v144 = vunpack.c.l.b16 %v112
    %v145 = vunpack.c.l.b16 %v113
    %v146 = vunpack.c.l.b16 %v114
    %v147 = vunpack.c.l.b16 %v115
    %v148 = vunpack.c.l.b16 %v116
    %v149 = vunpack.c.l.b16 %v117
    %v150 = vunpack.c.l.b16 %v118
    %v151 = vunpack.c.l.b16 %v119
    %v152 = vunpack.c.l.b16 %v120
    %v153 = vunpack.c.l.b16 %v121
    %v154 = vpack.c.b16 %v139, %v138
    %v155 = vpack.c.b16 %v141, %v140
    %v156 = vpack.c.b16 %v143, %v142
    %v157 = vpack.c.b16 %v145, %v144
    %v158 = vpack.c.b16 %v147, %v146
    %v159 = vpack.c.b16 %v149, %v148
    %v160 = vpack.c.b16 %v151, %v150
    %v161 = vpack.c.b16 %v153, %v152
    %170 = vmatprep.subr.bf16.mxu0 0
    %171 = vmatpush1.bf16.msra.mxu0 %v161
    %172 = vmatprep.subr.bf16.mxu0 0
    %173 = vmatpush1.bf16.msra.mxu0 %v160
    %174 = vmatprep.subr.bf16.mxu0 0
    %175 = vmatpush1.bf16.msra.mxu0 %v159
    %176 = vmatprep.subr.bf16.mxu0 0
    %177 = vmatpush1.bf16.msra.mxu0 %v158
    %178 = vmatprep.subr.bf16.mxu0 0
    %179 = vmatpush1.bf16.msra.mxu0 %v157
    %180 = vmatprep.subr.bf16.mxu0 0
    %181 = vmatpush1.bf16.msra.mxu0 %v156
    %182 = vmatprep.subr.bf16.mxu0 0
    %183 = vmatpush1.bf16.msra.mxu0 %v155
    %184 = vmatprep.subr.bf16.mxu0 0
    %185 = vmatpush1.bf16.msra.mxu0 %v154
    %186 = vmatprep.subr.bf16.mxu0 0
    %187 = vmatpush2.bf16.msra.mxu0 0
    %188 = vmatprep.subr.bf16.mxu0 0
    %189 = vmatpush2.bf16.msra.mxu0 0
    %190 = vmatprep.subr.bf16.mxu0 0
    %191 = vmatpush2.bf16.msra.mxu0 0
    %192 = vmatprep.subr.bf16.mxu0 0
    %193 = vmatpush2.bf16.msra.mxu0 0
    %194 = vmatprep.subr.bf16.mxu0 0
    %195 = vmatpush2.bf16.msra.mxu0 0
    %196 = vmatprep.subr.bf16.mxu0 0
    %197 = vmatpush2.bf16.msra.mxu0 0
    %198 = vmatprep.subr.bf16.mxu0 0
    %199 = vmatpush2.bf16.msra.mxu0 0
    %200 = vmatprep.subr.bf16.mxu0 0
    %201 = vmatpush2.bf16.msra.mxu0 0
    %202 = vmatprep.mubr.bf16.mxu0 0
    %203 = vmatmul.mubr.bf16.gmra.mxu0 %v103
    %v204 = vpop.f32.mrf.mxu0
    %v205 = vadd.f32 0.0, %v204
    %v206 = vpop.f32.mrf.mxu0
    %v207 = vpop.f32.mrf.mxu0
    %v208 = vadd.f32 0.0, %v207
    %v209 = vpop.f32.mrf.mxu0
    %210 = vmatprep.mubr.bf16.mxu0 0
    %211 = vmatmul.mubr.bf16.gmra.mxu0 %v104
    %v212 = vpop.f32.mrf.mxu0
    %v213 = vadd.f32 0.0, %v212
    %v214 = vpop.f32.mrf.mxu0
    %v215 = vpop.f32.mrf.mxu0
    %v216 = vpop.f32.mrf.mxu0
    %217 = vdwg.mxu0
    %v234 = vunpack.c.l.b16 %v84
    %v235 = vunpack.c.l.b16 %v85
    %v236 = vunpack.c.l.b16 %v86
    %v237 = vunpack.c.l.b16 %v87
    %v238 = vunpack.c.l.b16 %v88
    %v239 = vunpack.c.l.b16 %v89
    %v240 = vunpack.c.l.b16 %v90
    %v241 = vunpack.c.l.b16 %v91
    %v242 = vunpack.c.l.b16 %v92
    %v243 = vunpack.c.l.b16 %v93
    %v244 = vunpack.c.l.b16 %v94
    %v245 = vunpack.c.l.b16 %v95
    %v246 = vunpack.c.l.b16 %v96
    %v247 = vunpack.c.l.b16 %v97
    %v248 = vunpack.c.l.b16 %v98
    %v249 = vunpack.c.l.b16 %v99
    %v250 = vpack.c.b16 %v235, %v234
    %v251 = vpack.c.b16 %v237, %v236
    %v252 = vpack.c.b16 %v239, %v238
    %v253 = vpack.c.b16 %v241, %v240
    %v254 = vpack.c.b16 %v243, %v242
    %v255 = vpack.c.b16 %v245, %v244
    %v256 = vpack.c.b16 %v247, %v246
    %v257 = vpack.c.b16 %v249, %v248
    %266 = vmatprep.subr.bf16.mxu0 0
    %267 = vmatpush1.bf16.msra.mxu0 %v257
    %268 = vmatprep.subr.bf16.mxu0 0
    %269 = vmatpush1.bf16.msra.mxu0 %v256
    %270 = vmatprep.subr.bf16.mxu0 0
    %271 = vmatpush1.bf16.msra.mxu0 %v255
    %272 = vmatprep.subr.bf16.mxu0 0
    %273 = vmatpush1.bf16.msra.mxu0 %v254
    %274 = vmatprep.subr.bf16.mxu0 0
    %275 = vmatpush1.bf16.msra.mxu0 %v253
    %276 = vmatprep.subr.bf16.mxu0 0
    %277 = vmatpush1.bf16.msra.mxu0 %v252
    %278 = vmatprep.subr.bf16.mxu0 0
    %279 = vmatpush1.bf16.msra.mxu0 %v251
    %280 = vmatprep.subr.bf16.mxu0 0
    %281 = vmatpush1.bf16.msra.mxu0 %v250
    %282 = vmatprep.subr.bf16.mxu0 0
    %283 = vmatpush2.bf16.msra.mxu0 0
    %284 = vmatprep.subr.bf16.mxu0 0
    %285 = vmatpush2.bf16.msra.mxu0 0
    %286 = vmatprep.subr.bf16.mxu0 0
    %287 = vmatpush2.bf16.msra.mxu0 0
    %288 = vmatprep.subr.bf16.mxu0 0
    %289 = vmatpush2.bf16.msra.mxu0 0
    %290 = vmatprep.subr.bf16.mxu0 0
    %291 = vmatpush2.bf16.msra.mxu0 0
    %292 = vmatprep.subr.bf16.mxu0 0
    %293 = vmatpush2.bf16.msra.mxu0 0
    %294 = vmatprep.subr.bf16.mxu0 0
    %295 = vmatpush2.bf16.msra.mxu0 0
    %296 = vmatprep.subr.bf16.mxu0 0
    %297 = vmatpush2.bf16.msra.mxu0 0
    %298 = vmatprep.mubr.bf16.mxu0 0
    %299 = vmatmul.mubr.bf16.gmra.mxu0 %v82
    %v300 = vpop.f32.mrf.mxu0
    %v301 = vadd.f32 %v205, %v300
    %v302 = vpop.f32.mrf.mxu0
    %v303 = vpop.f32.mrf.mxu0
    %v304 = vadd.f32 %v208, %v303
    %v305 = vpop.f32.mrf.mxu0
    %306 = vmatprep.mubr.bf16.mxu0 0
    %307 = vmatmul.mubr.bf16.gmra.mxu0 %v83
    %v308 = vpop.f32.mrf.mxu0
    %v309 = vadd.f32 %v213, %v308
    %v310 = vpop.f32.mrf.mxu0
    %v311 = vpop.f32.mrf.mxu0
    %v312 = vpop.f32.mrf.mxu0
    %313 = vdwg.mxu0
    %v314 = vld [vmem:[%s0 + $0x2] sm:$0xff]
    %v315 = vld [vmem:[%s0 + $0xa] sm:$0xff]
    %v316 = vld [vmem:[%s0 + $0x12] sm:$0x3]
    %v317 = vpack.c.bf16 %v315, %v314
    %v318 = vpack.c.bf16 %v316, %v316
    %s319 = scalar_lea.vmem [#allocation2], 128
    %v320 = vld [vmem:[%s319] sm:$0xf]
    %v321 = vld [vmem:[%s319 + $0x4] sm:$0xf]
    %v322 = vld [vmem:[%s319 + $0x8] sm:$0xf]
    %v323 = vld [vmem:[%s319 + $0xc] sm:$0xf]
    %v324 = vld [vmem:[%s319 + $0x10] sm:$0xf]
    %v325 = vld [vmem:[%s319 + $0x14] sm:$0xf]
    %v326 = vld [vmem:[%s319 + $0x18] sm:$0xf]
    %v327 = vld [vmem:[%s319 + $0x1c] sm:$0xf]
    %v328 = vld [vmem:[%s319 + $0x20] sm:$0xf]
    %v329 = vld [vmem:[%s319 + $0x24] sm:$0xf]
    %v330 = vld [vmem:[%s319 + $0x28] sm:$0xf]
    %v331 = vld [vmem:[%s319 + $0x2c] sm:$0xf]
    %v332 = vld [vmem:[%s319 + $0x30] sm:$0xf]
    %v333 = vld [vmem:[%s319 + $0x34] sm:$0xf]
    %v334 = vld [vmem:[%s319 + $0x38] sm:$0xf]
    %v335 = vld [vmem:[%s319 + $0x3c] sm:$0xf]
    %v352 = vunpack.c.l.b16 %v320
    %v353 = vunpack.c.l.b16 %v321
    %v354 = vunpack.c.l.b16 %v322
    %v355 = vunpack.c.l.b16 %v323
    %v356 = vunpack.c.l.b16 %v324
    %v357 = vunpack.c.l.b16 %v325
    %v358 = vunpack.c.l.b16 %v326
    %v359 = vunpack.c.l.b16 %v327
    %v360 = vunpack.c.l.b16 %v328
    %v361 = vunpack.c.l.b16 %v329
    %v362 = vunpack.c.l.b16 %v330
    %v363 = vunpack.c.l.b16 %v331
    %v364 = vunpack.c.l.b16 %v332
    %v365 = vunpack.c.l.b16 %v333
    %v366 = vunpack.c.l.b16 %v334
    %v367 = vunpack.c.l.b16 %v335
    %v368 = vpack.c.b16 %v353, %v352
    %v369 = vpack.c.b16 %v355, %v354
    %v370 = vpack.c.b16 %v357, %v356
    %v371 = vpack.c.b16 %v359, %v358
    %v372 = vpack.c.b16 %v361, %v360
    %v373 = vpack.c.b16 %v363, %v362
    %v374 = vpack.c.b16 %v365, %v364
    %v375 = vpack.c.b16 %v367, %v366
    %384 = vmatprep.subr.bf16.mxu0 0
    %385 = vmatpush1.bf16.msra.mxu0 %v375
    %386 = vmatprep.subr.bf16.mxu0 0
    %387 = vmatpush1.bf16.msra.mxu0 %v374
    %388 = vmatprep.subr.bf16.mxu0 0
    %389 = vmatpush1.bf16.msra.mxu0 %v373
    %390 = vmatprep.subr.bf16.mxu0 0
    %391 = vmatpush1.bf16.msra.mxu0 %v372
    %392 = vmatprep.subr.bf16.mxu0 0
    %393 = vmatpush1.bf16.msra.mxu0 %v371
    %394 = vmatprep.subr.bf16.mxu0 0
    %395 = vmatpush1.bf16.msra.mxu0 %v370
    %396 = vmatprep.subr.bf16.mxu0 0
    %397 = vmatpush1.bf16.msra.mxu0 %v369
    %398 = vmatprep.subr.bf16.mxu0 0
    %399 = vmatpush1.bf16.msra.mxu0 %v368
    %400 = vmatprep.subr.bf16.mxu0 0
    %401 = vmatpush2.bf16.msra.mxu0 0
    %402 = vmatprep.subr.bf16.mxu0 0
    %403 = vmatpush2.bf16.msra.mxu0 0
    %404 = vmatprep.subr.bf16.mxu0 0
    %405 = vmatpush2.bf16.msra.mxu0 0
    %406 = vmatprep.subr.bf16.mxu0 0
    %407 = vmatpush2.bf16.msra.mxu0 0
    %408 = vmatprep.subr.bf16.mxu0 0
    %409 = vmatpush2.bf16.msra.mxu0 0
    %410 = vmatprep.subr.bf16.mxu0 0
    %411 = vmatpush2.bf16.msra.mxu0 0
    %412 = vmatprep.subr.bf16.mxu0 0
    %413 = vmatpush2.bf16.msra.mxu0 0
    %414 = vmatprep.subr.bf16.mxu0 0
    %415 = vmatpush2.bf16.msra.mxu0 0
    %416 = vmatprep.mubr.bf16.mxu0 0
    %417 = vmatmul.mubr.bf16.gmra.mxu0 %v317
    %v418 = vpop.f32.mrf.mxu0
    %v419 = vadd.f32 0.0, %v418
    %v420 = vpop.f32.mrf.mxu0
    %v421 = vpop.f32.mrf.mxu0
    %v422 = vadd.f32 0.0, %v421
    %v423 = vpop.f32.mrf.mxu0
    %424 = vmatprep.mubr.bf16.mxu0 0
    %425 = vmatmul.mubr.bf16.gmra.mxu0 %v318
    %v426 = vpop.f32.mrf.mxu0
    %v427 = vadd.f32 0.0, %v426
    %v428 = vpop.f32.mrf.mxu0
    %v429 = vpop.f32.mrf.mxu0
    %v430 = vpop.f32.mrf.mxu0
    %431 = vdwg.mxu0
    %v432 = vadd.f32 %v301, %v419
    %v433 = vadd.f32 %v304, %v422
    %v434 = vadd.f32 %v309, %v427
    %v435 = vlaneseq
    %v436 = vshrl.u32 %v435, 7
    %v437 = vadd.s32 %v436, 8
    %v438 = vadd.s32 %v436, 16
    %vm439 = vcmp.ge.s32.totalorder %v436, 1
    %vm440 = vcmp.ge.s32.totalorder %v437, 1
    %vm441 = vcmp.ge.s32.totalorder %v438, 1
    %vm442 = vcmp.le.s32.totalorder %v436, 16
    %vm443 = vcmp.le.s32.totalorder %v437, 16
    %vm444 = vcmp.le.s32.totalorder %v438, 16
    %vm445 = vmand %vm439, %vm442
    %vm446 = vmand %vm440, %vm443
    %vm447 = vmand %vm441, %vm444
    %v448 = vsel %vm445, %v432, 0.0
    %v449 = vsel %vm446, %v433, 0.0
    %v450 = vsel %vm447, %v434, 0.0
    %v451 = vadd.f32 %v448, %v449
    %vm452 = vcmask 1041408
    %v453 = vsel %vm452, %v450, 0.0
    %v454 = vadd.f32 %v451, %v453
    %v455 = vrot.slane %v454, 4
    %v456 = vadd.f32 %v454, %v455
    %v457 = vrot.slane %v456, 2
    %v458 = vadd.f32 %v456, %v457
    %v459 = vrot.slane %v458, 1
    %v460 = vadd.f32 %v458, %v459
    %v461 = vmul.f32 %v448, %v448
    %v462 = vmul.f32 %v449, %v449
    %v463 = vmul.f32 %v450, %v450
    %v464 = vadd.f32 %v461, %v462
    %v465 = vsel %vm452, %v463, 0.0
    %v466 = vadd.f32 %v464, %v465
    %v467 = vrot.slane %v466, 4
    %v468 = vadd.f32 %v466, %v467
    %v469 = vrot.slane %v468, 2
    %v470 = vadd.f32 %v468, %v469
    %v471 = vrot.slane %v470, 1
    %v472 = vadd.f32 %v470, %v471
    %vm473 = vcmp.eq.s32.totalorder %v436, 0
    %v474 = vsel %vm473, %v460, %v472
    %475 = vmatprep.subr.mxu0 0.0
    %476 = vmatpush1.msra.mxu0 %v77
    %477 = vmatprep.subr.mxu0 0.0
    %478 = vmatpush1.msra.mxu0 %v76
    %479 = vmatprep.subr.mxu0 0.0
    %480 = vmatpush1.msra.mxu0 %v75
    %481 = vmatprep.subr.mxu0 0.0
    %482 = vmatpush1.msra.mxu0 %v74
    %483 = vmatprep.subr.mxu0 0.0
    %484 = vmatpush1.msra.mxu0 %v73
    %485 = vmatprep.subr.mxu0 0.0
    %486 = vmatpush1.msra.mxu0 %v72
    %487 = vmatprep.subr.mxu0 0.0
    %488 = vmatpush1.msra.mxu0 %v71
    %489 = vmatprep.subr.mxu0 0.0
    %490 = vmatpush1.msra.mxu0 %v70
    %491 = vmatprep.subr.mxu0 0.0
    %492 = vmatpush1.msra.mxu0 %v69
    %493 = vmatprep.subr.mxu0 0.0
    %494 = vmatpush1.msra.mxu0 %v68
    %495 = vmatprep.subr.mxu0 0.0
    %496 = vmatpush1.msra.mxu0 %v67
    %497 = vmatprep.subr.mxu0 0.0
    %498 = vmatpush1.msra.mxu0 %v66
    %499 = vmatprep.subr.mxu0 0.0
    %500 = vmatpush1.msra.mxu0 %v65
    %501 = vmatprep.subr.mxu0 0.0
    %502 = vmatpush1.msra.mxu0 %v64
    %503 = vmatprep.subr.mxu0 0.0
    %504 = vmatpush1.msra.mxu0 %v63
    %505 = vmatprep.subr.mxu0 0.0
    %506 = vmatpush1.msra.mxu0 %v62
    %507 = vmatprep.subr.mxu0 0.0
    %508 = vmatpush2.msra.mxu0 0.0
    %509 = vmatprep.subr.mxu0 0.0
    %510 = vmatpush2.msra.mxu0 0.0
    %511 = vmatprep.subr.mxu0 0.0
    %512 = vmatpush2.msra.mxu0 0.0
    %513 = vmatprep.subr.mxu0 0.0
    %514 = vmatpush2.msra.mxu0 0.0
    %515 = vmatprep.subr.mxu0 0.0
    %516 = vmatpush2.msra.mxu0 0.0
    %517 = vmatprep.subr.mxu0 0.0
    %518 = vmatpush2.msra.mxu0 0.0
    %519 = vmatprep.subr.mxu0 0.0
    %520 = vmatpush2.msra.mxu0 0.0
    %521 = vmatprep.subr.mxu0 0.0
    %522 = vmatpush2.msra.mxu0 0.0
    %523 = vmatprep.subr.mxu0 0.0
    %524 = vmatpush2.msra.mxu0 0.0
    %525 = vmatprep.subr.mxu0 0.0
    %526 = vmatpush2.msra.mxu0 0.0
    %527 = vmatprep.subr.mxu0 0.0
    %528 = vmatpush2.msra.mxu0 0.0
    %529 = vmatprep.subr.mxu0 0.0
    %530 = vmatpush2.msra.mxu0 0.0
    %531 = vmatprep.subr.mxu0 0.0
    %532 = vmatpush2.msra.mxu0 0.0
    %533 = vmatprep.subr.mxu0 0.0
    %534 = vmatpush2.msra.mxu0 0.0
    %535 = vmatprep.subr.mxu0 0.0
    %536 = vmatpush2.msra.mxu0 0.0
    %537 = vmatprep.subr.mxu0 0.0
    %538 = vmatpush2.msra.mxu0 0.0
    %539 = vmatprep.mubr.f32.mxu0 0.0
    %540 = vmatmul.mubr.f32.gmra.mxu0 %v474
    %v541 = vpop.f32.mrf.mxu0
    %v542 = vadd.f32 0.0, %v541
    %v543 = vpop.f32.mrf.mxu0
    %544 = vdwg.mxu0
    %v545 = vmul.f32 %v542, 0.001953125
    %v546 = vmul.f32 %v545, %v545
    %v548 = vrot.slane %v546, 7
    %v550 = vsub.f32 %v545, %v548
    %v551 = vld [vmem:[%s3] sm:$0x1]
    %v552 = vadd.f32 %v550, 1e-05
    %v553 = vrsqrt.pop %v552
    %v556 = vunpack.c.l.s4 1966171168
    %v557 = vunpack.c.0.s8 %v556
    %v558 = vlaneseq
    %v559 = vshrl.u32 %v558, 7
    %v560 = vsub.s32 %v557, %v559
    %v561 = vrot.slane %v553, %v560
    %v562 = vcombine.high %v561, %v561
    %v564 = vunpack.c.l.s4 1966171168
    %v565 = vunpack.c.0.s8 %v564
    %v566 = vlaneseq
    %v567 = vshrl.u32 %v566, 7
    %v568 = vsub.s32 %v565, %v567
    %v569 = vrot.slane %v562, %v568
    %v571 = vmul.f32 %v551, %v569
    %v572 = vld [vmem:[%s4] sm:$0x1]
    %v573 = vmul.f32 %v545, %v571
    %v574 = vsub.f32 %v572, %v573
    %v576 = vlaneseq
    %v577 = vshrl.u32 %v576, 7
    %v578 = vsub.s32 0, %v577
    %v579 = vrot.slane %v571, %v578
    %v582 = vlaneseq
    %v583 = vshrl.u32 %v582, 7
    %v584 = vsub.s32 0, %v583
    %v585 = vrot.slane %v574, %v584
    %v587 = vsel %vm473, %v579, %v585
    %vm588 = vcmask 31744
    %v590 = vsel %vm588, %v587, 0
    %vm592 = vcmask 1043456
    %v594 = vsel %vm592, %v78, 0
    %596 = vmatprep.subr.mxu0 0.0
    %597 = vmatpush1.msra.mxu0 0.0
    %598 = vmatprep.subr.mxu0 0.0
    %599 = vmatpush1.msra.mxu0 0.0
    %600 = vmatprep.subr.mxu0 0.0
    %601 = vmatpush1.msra.mxu0 0.0
    %602 = vmatprep.subr.mxu0 0.0
    %603 = vmatpush1.msra.mxu0 0.0
    %604 = vmatprep.subr.mxu0 0.0
    %605 = vmatpush1.msra.mxu0 0.0
    %606 = vmatprep.subr.mxu0 0.0
    %607 = vmatpush1.msra.mxu0 0.0
    %608 = vmatprep.subr.mxu0 0.0
    %609 = vmatpush1.msra.mxu0 0.0
    %610 = vmatprep.subr.mxu0 0.0
    %611 = vmatpush1.msra.mxu0 0.0
    %612 = vmatprep.subr.mxu0 0.0
    %613 = vmatpush1.msra.mxu0 0.0
    %614 = vmatprep.subr.mxu0 0.0
    %615 = vmatpush1.msra.mxu0 0.0
    %616 = vmatprep.subr.mxu0 0.0
    %617 = vmatpush1.msra.mxu0 0.0
    %618 = vmatprep.subr.mxu0 0.0
    %619 = vmatpush1.msra.mxu0 0.0
    %620 = vmatprep.subr.mxu0 0.0
    %621 = vmatpush1.msra.mxu0 0.0
    %622 = vmatprep.subr.mxu0 0.0
    %623 = vmatpush1.msra.mxu0 0.0
    %624 = vmatprep.subr.mxu0 0.0
    %625 = vmatpush1.msra.mxu0 0.0
    %626 = vmatprep.subr.mxu0 0.0
    %627 = vmatpush1.msra.mxu0 %v594
    %628 = vmatprep.subr.mxu0 0.0
    %629 = vmatpush2.msra.mxu0 0.0
    %630 = vmatprep.subr.mxu0 0.0
    %631 = vmatpush2.msra.mxu0 0.0
    %632 = vmatprep.subr.mxu0 0.0
    %633 = vmatpush2.msra.mxu0 0.0
    %634 = vmatprep.subr.mxu0 0.0
    %635 = vmatpush2.msra.mxu0 0.0
    %636 = vmatprep.subr.mxu0 0.0
    %637 = vmatpush2.msra.mxu0 0.0
    %638 = vmatprep.subr.mxu0 0.0
    %639 = vmatpush2.msra.mxu0 0.0
    %640 = vmatprep.subr.mxu0 0.0
    %641 = vmatpush2.msra.mxu0 0.0
    %642 = vmatprep.subr.mxu0 0.0
    %643 = vmatpush2.msra.mxu0 0.0
    %644 = vmatprep.subr.mxu0 0.0
    %645 = vmatpush2.msra.mxu0 0.0
    %646 = vmatprep.subr.mxu0 0.0
    %647 = vmatpush2.msra.mxu0 0.0
    %648 = vmatprep.subr.mxu0 0.0
    %649 = vmatpush2.msra.mxu0 0.0
    %650 = vmatprep.subr.mxu0 0.0
    %651 = vmatpush2.msra.mxu0 0.0
    %652 = vmatprep.subr.mxu0 0.0
    %653 = vmatpush2.msra.mxu0 0.0
    %654 = vmatprep.subr.mxu0 0.0
    %655 = vmatpush2.msra.mxu0 0.0
    %656 = vmatprep.subr.mxu0 0.0
    %657 = vmatpush2.msra.mxu0 0.0
    %658 = vmatprep.subr.mxu0 0.0
    %659 = vmatpush2.msra.mxu0 0.0
    %660 = vmatprep.mubr.f32.mxu0 0.0
    %661 = vmatmul.mubr.f32.gmra.mxu0 %v590
    %v662 = vpop.f32.mrf.mxu0
    %v663 = vadd.f32 0.0, %v662
    %v664 = vpop.f32.mrf.mxu0
    %665 = vdwg.mxu0
    %v666 = vlaneseq
    %v667 = vshrl.u32 %v666, 7
    %v668 = vsub.s32 0, %v667
    %v669 = vrot.slane %v663, %v668
    %v670 = vmul.f32 %v448, %v669
    %v671 = vmul.f32 %v449, %v669
    %v672 = vmul.f32 %v450, %v669
    %v673 = vlaneseq
    %v674 = vshrl.u32 %v673, 7
    %v675 = vsub.s32 1, %v674
    %v676 = vrot.slane %v663, %v675
    %v677 = vadd.f32 %v670, %v676
    %v678 = vadd.f32 %v671, %v676
    %v679 = vadd.f32 %v672, %v676
    %v680 = vmax.f32 %v677, 0.0
    %v681 = vmax.f32 %v678, 0.0
    %v682 = vmax.f32 %v679, 0.0
    %v683 = vsel %vm445, %v680, 0.0
    %v684 = vsel %vm446, %v681, 0.0
    %v685 = vsel %vm447, %v682, 0.0
    %v686 = vpack.c.bf16 %v684, %v683
    %v687 = vld [vmem:[#allocation5] sm:$0xf]
    %v688 = vld [vmem:[#allocation5 + $0x4] sm:$0xf]
    %v689 = vld [vmem:[#allocation5 + $0x8] sm:$0xf]
    %v690 = vld [vmem:[#allocation5 + $0xc] sm:$0xf]
    %v691 = vld [vmem:[#allocation5 + $0x10] sm:$0xf]
    %v692 = vld [vmem:[#allocation5 + $0x14] sm:$0xf]
    %v693 = vld [vmem:[#allocation5 + $0x18] sm:$0xf]
    %v694 = vld [vmem:[#allocation5 + $0x1c] sm:$0xf]
    %v695 = vld [vmem:[#allocation5 + $0x20] sm:$0xf]
    %v696 = vld [vmem:[#allocation5 + $0x24] sm:$0xf]
    %v697 = vld [vmem:[#allocation5 + $0x28] sm:$0xf]
    %v698 = vld [vmem:[#allocation5 + $0x2c] sm:$0xf]
    %v699 = vld [vmem:[#allocation5 + $0x30] sm:$0xf]
    %v700 = vld [vmem:[#allocation5 + $0x34] sm:$0xf]
    %v701 = vld [vmem:[#allocation5 + $0x38] sm:$0xf]
    %v702 = vld [vmem:[#allocation5 + $0x3c] sm:$0xf]
    %v703 = vpack.c.bf16 %v685, %v685
    %s704 = scalar_lea.vmem [#allocation5], 64
    %v705 = vld [vmem:[%s704] sm:$0xf]
    %v706 = vld [vmem:[%s704 + $0x4] sm:$0xf]
    %v707 = vld [vmem:[%s704 + $0x8] sm:$0xf]
    %v708 = vld [vmem:[%s704 + $0xc] sm:$0xf]
    %v709 = vld [vmem:[%s704 + $0x10] sm:$0xf]
    %v710 = vld [vmem:[%s704 + $0x14] sm:$0xf]
    %v711 = vld [vmem:[%s704 + $0x18] sm:$0xf]
    %v712 = vld [vmem:[%s704 + $0x1c] sm:$0xf]
    %v713 = vld [vmem:[%s704 + $0x20] sm:$0xf]
    %v714 = vld [vmem:[%s704 + $0x24] sm:$0xf]
    %v715 = vld [vmem:[%s704 + $0x28] sm:$0xf]
    %v716 = vld [vmem:[%s704 + $0x2c] sm:$0xf]
    %v717 = vld [vmem:[%s704 + $0x30] sm:$0xf]
    %v718 = vld [vmem:[%s704 + $0x34] sm:$0xf]
    %v719 = vld [vmem:[%s704 + $0x38] sm:$0xf]
    %v720 = vld [vmem:[%s704 + $0x3c] sm:$0xf]
    %vm721 = vsmask.f32 7424
    %v723 = vshrl.u32 %v686, 16
    %v725 = vshll.u32 %v686, 16
    %v727 = vrot.slane %v725, 1
    %v728 = vor.u32 %v723, %v727
    %v730 = vshll.u32 %v703, 16
    %v732 = vrot.slane %v730, 1
    %v733 = vsel %vm721, %v728, %v732
    %v751 = vunpack.c.l.b16 %v705
    %v752 = vunpack.c.l.b16 %v706
    %v753 = vunpack.c.l.b16 %v707
    %v754 = vunpack.c.l.b16 %v708
    %v755 = vunpack.c.l.b16 %v709
    %v756 = vunpack.c.l.b16 %v710
    %v757 = vunpack.c.l.b16 %v711
    %v758 = vunpack.c.l.b16 %v712
    %v759 = vunpack.c.l.b16 %v713
    %v760 = vunpack.c.l.b16 %v714
    %v761 = vunpack.c.l.b16 %v715
    %v762 = vunpack.c.l.b16 %v716
    %v763 = vunpack.c.l.b16 %v717
    %v764 = vunpack.c.l.b16 %v718
    %v765 = vunpack.c.l.b16 %v719
    %v766 = vunpack.c.l.b16 %v720
    %v767 = vpack.c.b16 %v752, %v751
    %v768 = vpack.c.b16 %v754, %v753
    %v769 = vpack.c.b16 %v756, %v755
    %v770 = vpack.c.b16 %v758, %v757
    %v771 = vpack.c.b16 %v760, %v759
    %v772 = vpack.c.b16 %v762, %v761
    %v773 = vpack.c.b16 %v764, %v763
    %v774 = vpack.c.b16 %v766, %v765
    %783 = vmatprep.subr.bf16.mxu0 0
    %784 = vmatpush1.bf16.msra.mxu0 %v774
    %785 = vmatprep.subr.bf16.mxu0 0
    %786 = vmatpush1.bf16.msra.mxu0 %v773
    %787 = vmatprep.subr.bf16.mxu0 0
    %788 = vmatpush1.bf16.msra.mxu0 %v772
    %789 = vmatprep.subr.bf16.mxu0 0
    %790 = vmatpush1.bf16.msra.mxu0 %v771
    %791 = vmatprep.subr.bf16.mxu0 0
    %792 = vmatpush1.bf16.msra.mxu0 %v770
    %793 = vmatprep.subr.bf16.mxu0 0
    %794 = vmatpush1.bf16.msra.mxu0 %v769
    %795 = vmatprep.subr.bf16.mxu0 0
    %796 = vmatpush1.bf16.msra.mxu0 %v768
    %797 = vmatprep.subr.bf16.mxu0 0
    %798 = vmatpush1.bf16.msra.mxu0 %v767
    %799 = vmatprep.subr.bf16.mxu0 0
    %800 = vmatpush2.bf16.msra.mxu0 0
    %801 = vmatprep.subr.bf16.mxu0 0
    %802 = vmatpush2.bf16.msra.mxu0 0
    %803 = vmatprep.subr.bf16.mxu0 0
    %804 = vmatpush2.bf16.msra.mxu0 0
    %805 = vmatprep.subr.bf16.mxu0 0
    %806 = vmatpush2.bf16.msra.mxu0 0
    %807 = vmatprep.subr.bf16.mxu0 0
    %808 = vmatpush2.bf16.msra.mxu0 0
    %809 = vmatprep.subr.bf16.mxu0 0
    %810 = vmatpush2.bf16.msra.mxu0 0
    %811 = vmatprep.subr.bf16.mxu0 0
    %812 = vmatpush2.bf16.msra.mxu0 0
    %813 = vmatprep.subr.bf16.mxu0 0
    %814 = vmatpush2.bf16.msra.mxu0 0
    %815 = vmatprep.mubr.bf16.mxu0 0
    %816 = vmatmul.mubr.bf16.gmra.mxu0 %v733
    %v817 = vpop.f32.mrf.mxu0
    %v818 = vadd.f32 0.0, %v817
    %v819 = vpop.f32.mrf.mxu0
    %v820 = vpop.f32.mrf.mxu0
    %v821 = vadd.f32 0.0, %v820
    %v822 = vpop.f32.mrf.mxu0
    %823 = vdwg.mxu0
    %v840 = vunpack.c.l.b16 %v687
    %v841 = vunpack.c.l.b16 %v688
    %v842 = vunpack.c.l.b16 %v689
    %v843 = vunpack.c.l.b16 %v690
    %v844 = vunpack.c.l.b16 %v691
    %v845 = vunpack.c.l.b16 %v692
    %v846 = vunpack.c.l.b16 %v693
    %v847 = vunpack.c.l.b16 %v694
    %v848 = vunpack.c.l.b16 %v695
    %v849 = vunpack.c.l.b16 %v696
    %v850 = vunpack.c.l.b16 %v697
    %v851 = vunpack.c.l.b16 %v698
    %v852 = vunpack.c.l.b16 %v699
    %v853 = vunpack.c.l.b16 %v700
    %v854 = vunpack.c.l.b16 %v701
    %v855 = vunpack.c.l.b16 %v702
    %v856 = vpack.c.b16 %v841, %v840
    %v857 = vpack.c.b16 %v843, %v842
    %v858 = vpack.c.b16 %v845, %v844
    %v859 = vpack.c.b16 %v847, %v846
    %v860 = vpack.c.b16 %v849, %v848
    %v861 = vpack.c.b16 %v851, %v850
    %v862 = vpack.c.b16 %v853, %v852
    %v863 = vpack.c.b16 %v855, %v854
    %872 = vmatprep.subr.bf16.mxu0 0
    %873 = vmatpush1.bf16.msra.mxu0 %v863
    %874 = vmatprep.subr.bf16.mxu0 0
    %875 = vmatpush1.bf16.msra.mxu0 %v862
    %876 = vmatprep.subr.bf16.mxu0 0
    %877 = vmatpush1.bf16.msra.mxu0 %v861
    %878 = vmatprep.subr.bf16.mxu0 0
    %879 = vmatpush1.bf16.msra.mxu0 %v860
    %880 = vmatprep.subr.bf16.mxu0 0
    %881 = vmatpush1.bf16.msra.mxu0 %v859
    %882 = vmatprep.subr.bf16.mxu0 0
    %883 = vmatpush1.bf16.msra.mxu0 %v858
    %884 = vmatprep.subr.bf16.mxu0 0
    %885 = vmatpush1.bf16.msra.mxu0 %v857
    %886 = vmatprep.subr.bf16.mxu0 0
    %887 = vmatpush1.bf16.msra.mxu0 %v856
    %888 = vmatprep.subr.bf16.mxu0 0
    %889 = vmatpush2.bf16.msra.mxu0 0
    %890 = vmatprep.subr.bf16.mxu0 0
    %891 = vmatpush2.bf16.msra.mxu0 0
    %892 = vmatprep.subr.bf16.mxu0 0
    %893 = vmatpush2.bf16.msra.mxu0 0
    %894 = vmatprep.subr.bf16.mxu0 0
    %895 = vmatpush2.bf16.msra.mxu0 0
    %896 = vmatprep.subr.bf16.mxu0 0
    %897 = vmatpush2.bf16.msra.mxu0 0
    %898 = vmatprep.subr.bf16.mxu0 0
    %899 = vmatpush2.bf16.msra.mxu0 0
    %900 = vmatprep.subr.bf16.mxu0 0
    %901 = vmatpush2.bf16.msra.mxu0 0
    %902 = vmatprep.subr.bf16.mxu0 0
    %903 = vmatpush2.bf16.msra.mxu0 0
    %904 = vmatprep.mubr.bf16.mxu0 0
    %905 = vmatmul.mubr.bf16.gmra.mxu0 %v686
    %v906 = vpop.f32.mrf.mxu0
    %v907 = vadd.f32 %v818, %v906
    %v908 = vpop.f32.mrf.mxu0
    %v909 = vpop.f32.mrf.mxu0
    %v910 = vadd.f32 %v821, %v909
    %v911 = vpop.f32.mrf.mxu0
    %912 = vdwg.mxu0
    %s913 = scalar_lea.vmem [#allocation5], 128
    %v914 = vld [vmem:[%s913] sm:$0xf]
    %v915 = vld [vmem:[%s913 + $0x4] sm:$0xf]
    %v916 = vld [vmem:[%s913 + $0x8] sm:$0xf]
    %v917 = vld [vmem:[%s913 + $0xc] sm:$0xf]
    %v918 = vld [vmem:[%s913 + $0x10] sm:$0xf]
    %v919 = vld [vmem:[%s913 + $0x14] sm:$0xf]
    %v920 = vld [vmem:[%s913 + $0x18] sm:$0xf]
    %v921 = vld [vmem:[%s913 + $0x1c] sm:$0xf]
    %v922 = vld [vmem:[%s913 + $0x20] sm:$0xf]
    %v923 = vld [vmem:[%s913 + $0x24] sm:$0xf]
    %v924 = vld [vmem:[%s913 + $0x28] sm:$0xf]
    %v925 = vld [vmem:[%s913 + $0x2c] sm:$0xf]
    %v926 = vld [vmem:[%s913 + $0x30] sm:$0xf]
    %v927 = vld [vmem:[%s913 + $0x34] sm:$0xf]
    %v928 = vld [vmem:[%s913 + $0x38] sm:$0xf]
    %v929 = vld [vmem:[%s913 + $0x3c] sm:$0xf]
    %vm932 = vcmask 1046528
    %v933 = vrot.slane %v686, 1
    %v934 = vrot.slane %v703, 1
    %v935 = vsel %vm932, %v933, %v934
    %v953 = vunpack.c.l.b16 %v914
    %v954 = vunpack.c.l.b16 %v915
    %v955 = vunpack.c.l.b16 %v916
    %v956 = vunpack.c.l.b16 %v917
    %v957 = vunpack.c.l.b16 %v918
    %v958 = vunpack.c.l.b16 %v919
    %v959 = vunpack.c.l.b16 %v920
    %v960 = vunpack.c.l.b16 %v921
    %v961 = vunpack.c.l.b16 %v922
    %v962 = vunpack.c.l.b16 %v923
    %v963 = vunpack.c.l.b16 %v924
    %v964 = vunpack.c.l.b16 %v925
    %v965 = vunpack.c.l.b16 %v926
    %v966 = vunpack.c.l.b16 %v927
    %v967 = vunpack.c.l.b16 %v928
    %v968 = vunpack.c.l.b16 %v929
    %v969 = vpack.c.b16 %v954, %v953
    %v970 = vpack.c.b16 %v956, %v955
    %v971 = vpack.c.b16 %v958, %v957
    %v972 = vpack.c.b16 %v960, %v959
    %v973 = vpack.c.b16 %v962, %v961
    %v974 = vpack.c.b16 %v964, %v963
    %v975 = vpack.c.b16 %v966, %v965
    %v976 = vpack.c.b16 %v968, %v967
    %985 = vmatprep.subr.bf16.mxu0 0
    %986 = vmatpush1.bf16.msra.mxu0 %v976
    %987 = vmatprep.subr.bf16.mxu0 0
    %988 = vmatpush1.bf16.msra.mxu0 %v975
    %989 = vmatprep.subr.bf16.mxu0 0
    %990 = vmatpush1.bf16.msra.mxu0 %v974
    %991 = vmatprep.subr.bf16.mxu0 0
    %992 = vmatpush1.bf16.msra.mxu0 %v973
    %993 = vmatprep.subr.bf16.mxu0 0
    %994 = vmatpush1.bf16.msra.mxu0 %v972
    %995 = vmatprep.subr.bf16.mxu0 0
    %996 = vmatpush1.bf16.msra.mxu0 %v971
    %997 = vmatprep.subr.bf16.mxu0 0
    %998 = vmatpush1.bf16.msra.mxu0 %v970
    %999 = vmatprep.subr.bf16.mxu0 0
    %1000 = vmatpush1.bf16.msra.mxu0 %v969
    %1001 = vmatprep.subr.bf16.mxu0 0
    %1002 = vmatpush2.bf16.msra.mxu0 0
    %1003 = vmatprep.subr.bf16.mxu0 0
    %1004 = vmatpush2.bf16.msra.mxu0 0
    %1005 = vmatprep.subr.bf16.mxu0 0
    %1006 = vmatpush2.bf16.msra.mxu0 0
    %1007 = vmatprep.subr.bf16.mxu0 0
    %1008 = vmatpush2.bf16.msra.mxu0 0
    %1009 = vmatprep.subr.bf16.mxu0 0
    %1010 = vmatpush2.bf16.msra.mxu0 0
    %1011 = vmatprep.subr.bf16.mxu0 0
    %1012 = vmatpush2.bf16.msra.mxu0 0
    %1013 = vmatprep.subr.bf16.mxu0 0
    %1014 = vmatpush2.bf16.msra.mxu0 0
    %1015 = vmatprep.subr.bf16.mxu0 0
    %1016 = vmatpush2.bf16.msra.mxu0 0
    %1017 = vmatprep.mubr.bf16.mxu0 0
    %1018 = vmatmul.mubr.bf16.gmra.mxu0 %v935
    %v1019 = vpop.f32.mrf.mxu0
    %v1020 = vadd.f32 0.0, %v1019
    %v1021 = vpop.f32.mrf.mxu0
    %v1022 = vpop.f32.mrf.mxu0
    %v1023 = vadd.f32 0.0, %v1022
    %v1024 = vpop.f32.mrf.mxu0
    %1025 = vdwg.mxu0
    %v1026 = vadd.f32 %v907, %v1020
    %v1027 = vadd.f32 %v910, %v1023
    %v1028 = vadd.f32 %v1026, %v1027
    %v1029 = vrot.slane %v1028, 4
    %v1030 = vadd.f32 %v1028, %v1029
    %v1031 = vrot.slane %v1030, 2
    %v1032 = vadd.f32 %v1030, %v1031
    %v1033 = vrot.slane %v1032, 1
    %v1034 = vadd.f32 %v1032, %v1033
    %v1035 = vmul.f32 %v1026, %v1026
    %v1036 = vmul.f32 %v1027, %v1027
    %v1037 = vadd.f32 %v1035, %v1036
    %v1038 = vrot.slane %v1037, 4
    %v1039 = vadd.f32 %v1037, %v1038
    %v1040 = vrot.slane %v1039, 2
    %v1041 = vadd.f32 %v1039, %v1040
    %v1042 = vrot.slane %v1041, 1
    %v1043 = vadd.f32 %v1041, %v1042
    %v1044 = vsel %vm473, %v1034, %v1043
    %1045 = vmatprep.subr.mxu0 0.0
    %1046 = vmatpush1.msra.mxu0 %v77
    %1047 = vmatprep.subr.mxu0 0.0
    %1048 = vmatpush1.msra.mxu0 %v76
    %1049 = vmatprep.subr.mxu0 0.0
    %1050 = vmatpush1.msra.mxu0 %v75
    %1051 = vmatprep.subr.mxu0 0.0
    %1052 = vmatpush1.msra.mxu0 %v74
    %1053 = vmatprep.subr.mxu0 0.0
    %1054 = vmatpush1.msra.mxu0 %v73
    %1055 = vmatprep.subr.mxu0 0.0
    %1056 = vmatpush1.msra.mxu0 %v72
    %1057 = vmatprep.subr.mxu0 0.0
    %1058 = vmatpush1.msra.mxu0 %v71
    %1059 = vmatprep.subr.mxu0 0.0
    %1060 = vmatpush1.msra.mxu0 %v70
    %1061 = vmatprep.subr.mxu0 0.0
    %1062 = vmatpush1.msra.mxu0 %v69
    %1063 = vmatprep.subr.mxu0 0.0
    %1064 = vmatpush1.msra.mxu0 %v68
    %1065 = vmatprep.subr.mxu0 0.0
    %1066 = vmatpush1.msra.mxu0 %v67
    %1067 = vmatprep.subr.mxu0 0.0
    %1068 = vmatpush1.msra.mxu0 %v66
    %1069 = vmatprep.subr.mxu0 0.0
    %1070 = vmatpush1.msra.mxu0 %v65
    %1071 = vmatprep.subr.mxu0 0.0
    %1072 = vmatpush1.msra.mxu0 %v64
    %1073 = vmatprep.subr.mxu0 0.0
    %1074 = vmatpush1.msra.mxu0 %v63
    %1075 = vmatprep.subr.mxu0 0.0
    %1076 = vmatpush1.msra.mxu0 %v62
    %1077 = vmatprep.subr.mxu0 0.0
    %1078 = vmatpush2.msra.mxu0 0.0
    %1079 = vmatprep.subr.mxu0 0.0
    %1080 = vmatpush2.msra.mxu0 0.0
    %1081 = vmatprep.subr.mxu0 0.0
    %1082 = vmatpush2.msra.mxu0 0.0
    %1083 = vmatprep.subr.mxu0 0.0
    %1084 = vmatpush2.msra.mxu0 0.0
    %1085 = vmatprep.subr.mxu0 0.0
    %1086 = vmatpush2.msra.mxu0 0.0
    %1087 = vmatprep.subr.mxu0 0.0
    %1088 = vmatpush2.msra.mxu0 0.0
    %1089 = vmatprep.subr.mxu0 0.0
    %1090 = vmatpush2.msra.mxu0 0.0
    %1091 = vmatprep.subr.mxu0 0.0
    %1092 = vmatpush2.msra.mxu0 0.0
    %1093 = vmatprep.subr.mxu0 0.0
    %1094 = vmatpush2.msra.mxu0 0.0
    %1095 = vmatprep.subr.mxu0 0.0
    %1096 = vmatpush2.msra.mxu0 0.0
    %1097 = vmatprep.subr.mxu0 0.0
    %1098 = vmatpush2.msra.mxu0 0.0
    %1099 = vmatprep.subr.mxu0 0.0
    %1100 = vmatpush2.msra.mxu0 0.0
    %1101 = vmatprep.subr.mxu0 0.0
    %1102 = vmatpush2.msra.mxu0 0.0
    %1103 = vmatprep.subr.mxu0 0.0
    %1104 = vmatpush2.msra.mxu0 0.0
    %1105 = vmatprep.subr.mxu0 0.0
    %1106 = vmatpush2.msra.mxu0 0.0
    %1107 = vmatprep.subr.mxu0 0.0
    %1108 = vmatpush2.msra.mxu0 0.0
    %1109 = vmatprep.mubr.f32.mxu0 0.0
    %1110 = vmatmul.mubr.f32.gmra.mxu0 %v1044
    %v1111 = vpop.f32.mrf.mxu0
    %v1112 = vadd.f32 0.0, %v1111
    %v1113 = vpop.f32.mrf.mxu0
    %1114 = vdwg.mxu0
    %v1115 = vmul.f32 %v1112, 0.001953125
    %v1116 = vmul.f32 %v1115, %v1115
    %v1118 = vrot.slane %v1116, 7
    %v1120 = vsub.f32 %v1115, %v1118
    %v1121 = vld [vmem:[%s5] sm:$0x1]
    %v1122 = vadd.f32 %v1120, 1e-05
    %v1123 = vrsqrt.pop %v1122
    %v1126 = vunpack.c.l.s4 1966171168
    %v1127 = vunpack.c.0.s8 %v1126
    %v1128 = vlaneseq
    %v1129 = vshrl.u32 %v1128, 7
    %v1130 = vsub.s32 %v1127, %v1129
    %v1131 = vrot.slane %v1123, %v1130
    %v1132 = vcombine.high %v1131, %v1131
    %v1134 = vunpack.c.l.s4 1966171168
    %v1135 = vunpack.c.0.s8 %v1134
    %v1136 = vlaneseq
    %v1137 = vshrl.u32 %v1136, 7
    %v1138 = vsub.s32 %v1135, %v1137
    %v1139 = vrot.slane %v1132, %v1138
    %v1141 = vmul.f32 %v1121, %v1139
    %v1142 = vld [vmem:[%s6] sm:$0x1]
    %v1143 = vmul.f32 %v1115, %v1141
    %v1144 = vsub.f32 %v1142, %v1143
    %v1146 = vlaneseq
    %v1147 = vshrl.u32 %v1146, 7
    %v1148 = vsub.s32 0, %v1147
    %v1149 = vrot.slane %v1141, %v1148
    %v1152 = vlaneseq
    %v1153 = vshrl.u32 %v1152, 7
    %v1154 = vsub.s32 0, %v1153
    %v1155 = vrot.slane %v1144, %v1154
    %v1157 = vsel %vm473, %v1149, %v1155
    %v1159 = vsel %vm588, %v1157, 0
    %1161 = vmatprep.subr.mxu0 0.0
    %1162 = vmatpush1.msra.mxu0 0.0
    %1163 = vmatprep.subr.mxu0 0.0
    %1164 = vmatpush1.msra.mxu0 0.0
    %1165 = vmatprep.subr.mxu0 0.0
    %1166 = vmatpush1.msra.mxu0 0.0
    %1167 = vmatprep.subr.mxu0 0.0
    %1168 = vmatpush1.msra.mxu0 0.0
    %1169 = vmatprep.subr.mxu0 0.0
    %1170 = vmatpush1.msra.mxu0 0.0
    %1171 = vmatprep.subr.mxu0 0.0
    %1172 = vmatpush1.msra.mxu0 0.0
    %1173 = vmatprep.subr.mxu0 0.0
    %1174 = vmatpush1.msra.mxu0 0.0
    %1175 = vmatprep.subr.mxu0 0.0
    %1176 = vmatpush1.msra.mxu0 0.0
    %1177 = vmatprep.subr.mxu0 0.0
    %1178 = vmatpush1.msra.mxu0 0.0
    %1179 = vmatprep.subr.mxu0 0.0
    %1180 = vmatpush1.msra.mxu0 0.0
    %1181 = vmatprep.subr.mxu0 0.0
    %1182 = vmatpush1.msra.mxu0 0.0
    %1183 = vmatprep.subr.mxu0 0.0
    %1184 = vmatpush1.msra.mxu0 0.0
    %1185 = vmatprep.subr.mxu0 0.0
    %1186 = vmatpush1.msra.mxu0 0.0
    %1187 = vmatprep.subr.mxu0 0.0
    %1188 = vmatpush1.msra.mxu0 0.0
    %1189 = vmatprep.subr.mxu0 0.0
    %1190 = vmatpush1.msra.mxu0 0.0
    %1191 = vmatprep.subr.mxu0 0.0
    %1192 = vmatpush1.msra.mxu0 %v594
    %1193 = vmatprep.subr.mxu0 0.0
    %1194 = vmatpush2.msra.mxu0 0.0
    %1195 = vmatprep.subr.mxu0 0.0
    %1196 = vmatpush2.msra.mxu0 0.0
    %1197 = vmatprep.subr.mxu0 0.0
    %1198 = vmatpush2.msra.mxu0 0.0
    %1199 = vmatprep.subr.mxu0 0.0
    %1200 = vmatpush2.msra.mxu0 0.0
    %1201 = vmatprep.subr.mxu0 0.0
    %1202 = vmatpush2.msra.mxu0 0.0
    %1203 = vmatprep.subr.mxu0 0.0
    %1204 = vmatpush2.msra.mxu0 0.0
    %1205 = vmatprep.subr.mxu0 0.0
    %1206 = vmatpush2.msra.mxu0 0.0
    %1207 = vmatprep.subr.mxu0 0.0
    %1208 = vmatpush2.msra.mxu0 0.0
    %1209 = vmatprep.subr.mxu0 0.0
    %1210 = vmatpush2.msra.mxu0 0.0
    %1211 = vmatprep.subr.mxu0 0.0
    %1212 = vmatpush2.msra.mxu0 0.0
    %1213 = vmatprep.subr.mxu0 0.0
    %1214 = vmatpush2.msra.mxu0 0.0
    %1215 = vmatprep.subr.mxu0 0.0
    %1216 = vmatpush2.msra.mxu0 0.0
    %1217 = vmatprep.subr.mxu0 0.0
    %1218 = vmatpush2.msra.mxu0 0.0
    %1219 = vmatprep.subr.mxu0 0.0
    %1220 = vmatpush2.msra.mxu0 0.0
    %1221 = vmatprep.subr.mxu0 0.0
    %1222 = vmatpush2.msra.mxu0 0.0
    %1223 = vmatprep.subr.mxu0 0.0
    %1224 = vmatpush2.msra.mxu0 0.0
    %1225 = vmatprep.mubr.f32.mxu0 0.0
    %1226 = vmatmul.mubr.f32.gmra.mxu0 %v1159
    %v1227 = vpop.f32.mrf.mxu0
    %v1228 = vadd.f32 0.0, %v1227
    %v1229 = vpop.f32.mrf.mxu0
    %1230 = vdwg.mxu0
    %v1231 = vld [vmem:[%s0 + $0x2] sm:$0xff]
    %v1232 = vld [vmem:[%s0 + $0xa] sm:$0xff]
    %v1233 = vlaneseq
    %v1234 = vshrl.u32 %v1233, 7
    %v1235 = vsub.s32 0, %v1234
    %v1236 = vrot.slane %v1228, %v1235
    %v1237 = vmul.f32 %v1026, %v1236
    %v1238 = vmul.f32 %v1027, %v1236
    %v1239 = vlaneseq
    %v1240 = vshrl.u32 %v1239, 7
    %v1241 = vsub.s32 1, %v1240
    %v1242 = vrot.slane %v1228, %v1241
    %v1243 = vadd.f32 %v1237, %v1242
    %v1244 = vadd.f32 %v1238, %v1242
    %v1245 = vadd.f32 %v1243, %v1231
    %v1246 = vadd.f32 %v1244, %v1232
    %v1247 = vmax.f32 %v1245, 0.0
    %v1248 = vmax.f32 %v1246, 0.0
    %1249 = vst [vmem:[#allocation7] sm:$0xff] %v1247
    %1250 = vst [vmem:[#allocation7 + $0x8] sm:$0xff] %v1248
    // Predicated region
    $region46: #{tpu_custom_call.1} parent=1 // pred_check
      _
    $region47: #{tpu_custom_call.1} parent=1 // pred_check_branch
      %1252 = sbr.rel (0) target = $region49
    $region48: #{tpu_custom_call.1} parent=1 // pred_region
      %s1254 = ssub.s32 256, 256
      %1255 = vsyncadd [#allocation4], %s1254
      %s1256 = sshll.u32 [#allocation7], 4
      %s1257 = int_to_ptr.vmem [resolvable:$true] %s1256
      %1262 = dma.vmem_to_hbm [thread:$0]  %s1257, 256, %s9, [#allocation4], 128, 128, 8
    $region49: #{tpu_custom_call.1} parent=1 // pred_fallthru
      _
    // Predicated region
    $region50: #{tpu_custom_call.1} parent=1 // pred_check
      _
    $region51: #{tpu_custom_call.1} parent=1 // pred_check_branch
      %1264 = sbr.rel (0) target = $region53
    $region52: #{tpu_custom_call.1} parent=1 // pred_region
      %1265 = dma.done [#allocation4], 256
    $region53: #{tpu_custom_call.1} parent=1 // pred_fallthru
      _
    %1266 = vsyncpa [#allocation3], 1
    %1267 = vsyncpa [#allocation6], 1
    %1268 = vsyncpa [#allocation4], 1

</llo_original>
